<compile_context>
chip_gen: v7x
topology: tpu7x:2x2x1
jax: 0.10.0
libtpu: 0.0.40
codegen_flags: <defaults>
</compile_context>

<pallas_src>
import functools

import jax
import jax.numpy as jnp
from jax.experimental import pallas as pl
from jax.experimental.pallas import tpu as pltpu

# Model dims (synthetic, small but TPU-tile friendly).
D_MODEL = 128
D_FF = 256
LN_EPS = 1e-5  # torch.nn.LayerNorm default


def _round_up(x, m):
    return (x + m - 1) // m * m


def _ffn_kernel(x_ref, w1_ref, b1_ref, w2_ref, b2_ref, gamma_ref, beta_ref, o_ref):
    # x_ref: (TM, d_model) f32 tile of the flattened (B*S, d_model) input.
    # w1_ref: (d_model, d_ff) bf16, w2_ref: (d_ff, d_model) bf16.
    # b1/b2/gamma/beta: (1, dim) f32.
    x = x_ref[...]                          # f32 (kept for residual / LN)
    x_bf = x.astype(jnp.bfloat16)           # MXU operand

    # conv1 (1x1) == x @ W1 + b1 ; ReLU   (bf16 operands, f32 accumulation)
    h = jnp.dot(x_bf, w1_ref[...], preferred_element_type=jnp.float32)
    h = jnp.maximum(h + b1_ref[...], 0.0)

    # conv2 (1x1) == h @ W2               (bf16 operands, f32 accumulation)
    y = jnp.dot(h.astype(jnp.bfloat16), w2_ref[...],
                preferred_element_type=jnp.float32)

    # residual + b2, then LayerNorm over d_model -- all f32.
    z = y + (x + b2_ref[...])
    mean = jnp.mean(z, axis=-1, keepdims=True)
    zc = z - mean
    var = jnp.mean(zc * zc, axis=-1, keepdims=True)
    z_hat = zc * jax.lax.rsqrt(var + LN_EPS)
    o_ref[...] = (z_hat * gamma_ref[...] + beta_ref[...]).astype(o_ref.dtype)


def _vmem_limit_bytes(tile_m):
    """Estimate per-step VMEM (double-buffered tiles + intermediates) + headroom."""
    io_tiles = 2 * 2 * tile_m * D_MODEL * 4                   # x + out tiles, 2 buffers each, f32
    weights = 2 * 2 * (D_MODEL * D_FF * 2)                    # W1 + W2 bf16, double-buffered
    interm = tile_m * (D_FF * (4 + 2) + 4 * D_MODEL * 4)      # h f32 + h bf16 + y/z/zc/out f32
    est = int((io_tiles + weights + interm) * 1.5)             # 50% headroom
    # Floor at 24 MiB (cheap everywhere), cap at 48 MiB (inside v7x's 64 MiB physical).
    return min(48 << 20, max(24 << 20, est))


@functools.partial(jax.jit, static_argnames=("tile_m",))
def poswise_ffn(x, w1, b1, w2, b2, gamma, beta, *, tile_m=2048):
    """x: (B, S, d_model) float32.  Returns (B, S, d_model).

    tile_m: max rows of (B*S) per grid step.  Default 2048: large enough to
    amortize the ~0.35 us per-step pipeline overhead on v6e/v7x while the
    footprint (~12 MiB incl. double buffering + f32 intermediates) fits every
    generation once vmem_limit_bytes is set explicitly (done below).  The
    wrapper clamps it down for small inputs and splits large inputs into at
    least 2 blocks so both v7x TensorCores stay busy.  On v7x, tile_m=4096 is
    a reasonable manual override; on v5e there are diminishing returns past
    ~1024-2048.
    """
    B, S, D = x.shape
    assert D == D_MODEL
    M = B * S
    x2 = x.reshape(M, D)

    # --- tile_m selection -------------------------------------------------
    # (a) never tile past the data (avoids 10x+ wasted DMA/compute at small M);
    #     round_up(M, 8) keeps the sublane-divisibility constraint.
    tm = min(tile_m, _round_up(M, 8))
    # (b) for large inputs keep >= 2 grid blocks so the "parallel" axis can be
    #     sharded across both v7x TensorCores.
    if M > 512:
        tm = min(tm, _round_up(pl.cdiv(M, 2), 256))
    tm = max(tm, 8)
    n_blocks = pl.cdiv(M, tm)
    # No jnp.pad: a non-divisible last block is handled by Pallas (OOB reads
    # feed only rows whose writes are masked; all math here is row-independent).

    # Cast matmul weights to bf16 once (MXU operands, f32 accumulation in-kernel).
    w1_bf = w1.astype(jnp.bfloat16)
    w2_bf = w2.astype(jnp.bfloat16)

    out2 = pl.pallas_call(
        _ffn_kernel,
        out_shape=jax.ShapeDtypeStruct((M, D), x.dtype),
        grid_spec=pltpu.PrefetchScalarGridSpec(
            num_scalar_prefetch=0,
            grid=(n_blocks,),
            in_specs=[
                pl.BlockSpec((tm, D), lambda i: (i, 0)),       # x tile
                pl.BlockSpec((D, D_FF), lambda i: (0, 0)),     # W1 (bf16)
                pl.BlockSpec((1, D_FF), lambda i: (0, 0)),     # b1
                pl.BlockSpec((D_FF, D), lambda i: (0, 0)),     # W2 (bf16)
                pl.BlockSpec((1, D), lambda i: (0, 0)),        # b2
                pl.BlockSpec((1, D), lambda i: (0, 0)),        # gamma
                pl.BlockSpec((1, D), lambda i: (0, 0)),        # beta
            ],
            out_specs=pl.BlockSpec((tm, D), lambda i: (i, 0)),
        ),
        compiler_params=pltpu.CompilerParams(
            dimension_semantics=("parallel",),
            vmem_limit_bytes=_vmem_limit_bytes(tm),
        ),
    )(x2, w1_bf, b1, w2_bf, b2, gamma, beta)
    return out2.reshape(B, S, D)


def init_params(key):
    """Deterministic synthetic params matching the PyTorch module shapes.

    conv1.weight: (d_ff, d_model, 1) -> stored transposed as (d_model, d_ff)
    conv2.weight: (d_model, d_ff, 1) -> stored transposed as (d_ff, d_model)
    """
    k1, k2, k3, k4 = jax.random.split(key, 4)
    scale1 = 1.0 / jnp.sqrt(D_MODEL)
    scale2 = 1.0 / jnp.sqrt(D_FF)
    w1 = jax.random.uniform(k1, (D_MODEL, D_FF), jnp.float32, -scale1, scale1)
    b1 = jax.random.uniform(k2, (1, D_FF), jnp.float32, -scale1, scale1)
    w2 = jax.random.uniform(k3, (D_FF, D_MODEL), jnp.float32, -scale2, scale2)
    b2 = jax.random.uniform(k4, (1, D_MODEL), jnp.float32, -scale2, scale2)
    gamma = jnp.ones((1, D_MODEL), jnp.float32)   # LayerNorm weight init
    beta = jnp.zeros((1, D_MODEL), jnp.float32)   # LayerNorm bias init
    return w1, b1, w2, b2, gamma, beta


def reference_ffn(x, w1, b1, w2, b2, gamma, beta):
    """Pure-JAX f32 reference of the PyTorch forward."""
    h = jnp.maximum(jnp.einsum("bsd,df->bsf", x, w1) + b1[0], 0.0)
    y = jnp.einsum("bsf,fd->bsd", h, w2) + b2[0]
    z = y + x
    mean = jnp.mean(z, axis=-1, keepdims=True)
    var = jnp.mean((z - mean) ** 2, axis=-1, keepdims=True)
    return (z - mean) / jnp.sqrt(var + LN_EPS) * gamma[0] + beta[0]


if __name__ == "__main__":
    key = jax.random.PRNGKey(0)
    kx, kp = jax.random.split(key)

    B, S = 2, 16
    x = jax.random.normal(kx, (B, S, D_MODEL), jnp.float32)
    params = init_params(kp)

    out = poswise_ffn(x, *params)
    out = jax.block_until_ready(out)

    ref = reference_ffn(x, *params)
    assert out.shape == (B, S, D_MODEL)
    # bf16 MXU operands (f32 accumulation) -> loosened tolerance vs. the f32 reference.
    assert jnp.allclose(out, ref, atol=5e-2, rtol=5e-2), "mismatch vs reference"
    assert bool(jnp.all(jnp.isfinite(out))), "non-finite output"

    print("KERNEL_OK")
</pallas_src>

<mosaic_0001>
module attributes {stable_mosaic.version = 11 : i64} {
  func.func @_ffn_kernel(%arg0: i32, %arg1: memref<32x128xf32, #tpu.memory_space<vmem>>, %arg2: memref<128x256xbf16, #tpu.memory_space<vmem>>, %arg3: memref<1x256xf32, #tpu.memory_space<vmem>>, %arg4: memref<256x128xbf16, #tpu.memory_space<vmem>>, %arg5: memref<1x128xf32, #tpu.memory_space<vmem>>, %arg6: memref<1x128xf32, #tpu.memory_space<vmem>>, %arg7: memref<1x128xf32, #tpu.memory_space<vmem>>, %arg8: memref<32x128xf32, #tpu.memory_space<vmem>>) attributes {dimension_semantics = [#tpu.dimension_semantics<parallel>], iteration_bounds = array<i64: 1>, scalar_prefetch = 0 : i64, scratch_operands = 0 : i64, tpu.core_type = #tpu.core_type<tc>, window_params = [{transform_indices = @transform_0, window_bounds = array<i64: 32, 128>}, {pipeline_mode = #tpu.pipeline_mode<synchronous>, transform_indices = @transform_1, window_bounds = array<i64: 128, 256>}, {pipeline_mode = #tpu.pipeline_mode<synchronous>, transform_indices = @transform_2, window_bounds = array<i64: 1, 256>}, {pipeline_mode = #tpu.pipeline_mode<synchronous>, transform_indices = @transform_3, window_bounds = array<i64: 256, 128>}, {pipeline_mode = #tpu.pipeline_mode<synchronous>, transform_indices = @transform_4, window_bounds = array<i64: 1, 128>}, {pipeline_mode = #tpu.pipeline_mode<synchronous>, transform_indices = @transform_5, window_bounds = array<i64: 1, 128>}, {pipeline_mode = #tpu.pipeline_mode<synchronous>, transform_indices = @transform_6, window_bounds = array<i64: 1, 128>}, {transform_indices = @transform_7, window_bounds = array<i64: 32, 128>}]} {
    %c0 = arith.constant 0 : index
    %c0_0 = arith.constant 0 : index
    %0 = vector.load %arg1[%c0, %c0_0] : memref<32x128xf32, #tpu.memory_space<vmem>>, vector<32x128xf32>
    %1 = arith.truncf %0 : vector<32x128xf32> to vector<32x128xbf16>
    %c0_1 = arith.constant 0 : index
    %c0_2 = arith.constant 0 : index
    %2 = vector.load %arg2[%c0_1, %c0_2] : memref<128x256xbf16, #tpu.memory_space<vmem>>, vector<128x256xbf16>
    %cst = arith.constant dense<0.000000e+00> : vector<32x256xf32>
    %3 = tpu.matmul %1, %2, %cst {dimension_numbers = #tpu.dot_dimension_numbers<[1], [0], [0], [1], [0, 0, 1, 1], [], []>} : vector<32x128xbf16>, vector<128x256xbf16>, vector<32x256xf32> -> vector<32x256xf32>
    %c0_3 = arith.constant 0 : index
    %c0_4 = arith.constant 0 : index
    %4 = vector.load %arg3[%c0_3, %c0_4] : memref<1x256xf32, #tpu.memory_space<vmem>>, vector<1x256xf32>
    %5 = vector.broadcast %4 : vector<1x256xf32> to vector<32x256xf32>
    %6 = arith.addf %3, %5 : vector<32x256xf32>
    %cst_5 = arith.constant 0.000000e+00 : f32
    %7 = vector.broadcast %cst_5 : f32 to vector<32x256xf32>
    %8 = arith.maximumf %6, %7 : vector<32x256xf32>
    %9 = arith.truncf %8 : vector<32x256xf32> to vector<32x256xbf16>
    %c0_6 = arith.constant 0 : index
    %c0_7 = arith.constant 0 : index
    %10 = vector.load %arg4[%c0_6, %c0_7] : memref<256x128xbf16, #tpu.memory_space<vmem>>, vector<256x128xbf16>
    %cst_8 = arith.constant dense<0.000000e+00> : vector<32x128xf32>
    %11 = tpu.matmul %9, %10, %cst_8 {dimension_numbers = #tpu.dot_dimension_numbers<[1], [0], [0], [1], [0, 0, 1, 1], [], []>} : vector<32x256xbf16>, vector<256x128xbf16>, vector<32x128xf32> -> vector<32x128xf32>
    %c0_9 = arith.constant 0 : index
    %c0_10 = arith.constant 0 : index
    %12 = vector.load %arg5[%c0_9, %c0_10] : memref<1x128xf32, #tpu.memory_space<vmem>>, vector<1x128xf32>
    %13 = vector.broadcast %12 : vector<1x128xf32> to vector<32x128xf32>
    %14 = arith.addf %0, %13 : vector<32x128xf32>
    %15 = arith.addf %11, %14 : vector<32x128xf32>
    %cst_11 = arith.constant dense<0.000000e+00> : vector<32xf32>
    %16 = vector.multi_reduction <add>, %15, %cst_11 [1] : vector<32x128xf32> to vector<32xf32>
    %17 = vector.shape_cast %16 : vector<32xf32> to vector<32x1xf32>
    %cst_12 = arith.constant 1.280000e+02 : f32
    %18 = vector.broadcast %cst_12 : f32 to vector<32x1xf32>
    %19 = arith.divf %17, %18 : vector<32x1xf32>
    %20 = vector.broadcast %19 : vector<32x1xf32> to vector<32x128xf32>
    %21 = arith.subf %15, %20 : vector<32x128xf32>
    %22 = arith.mulf %21, %21 : vector<32x128xf32>
    %cst_13 = arith.constant dense<0.000000e+00> : vector<32xf32>
    %23 = vector.multi_reduction <add>, %22, %cst_13 [1] : vector<32x128xf32> to vector<32xf32>
    %24 = vector.shape_cast %23 : vector<32xf32> to vector<32x1xf32>
    %cst_14 = arith.constant 1.280000e+02 : f32
    %25 = vector.broadcast %cst_14 : f32 to vector<32x1xf32>
    %26 = arith.divf %24, %25 : vector<32x1xf32>
    %cst_15 = arith.constant 9.99999974E-6 : f32
    %27 = vector.broadcast %cst_15 : f32 to vector<32x1xf32>
    %28 = arith.addf %26, %27 : vector<32x1xf32>
    %29 = math.rsqrt %28 : vector<32x1xf32>
    %30 = vector.broadcast %29 : vector<32x1xf32> to vector<32x128xf32>
    %31 = arith.mulf %21, %30 : vector<32x128xf32>
    %c0_16 = arith.constant 0 : index
    %c0_17 = arith.constant 0 : index
    %32 = vector.load %arg6[%c0_16, %c0_17] : memref<1x128xf32, #tpu.memory_space<vmem>>, vector<1x128xf32>
    %33 = vector.broadcast %32 : vector<1x128xf32> to vector<32x128xf32>
    %34 = arith.mulf %31, %33 : vector<32x128xf32>
    %c0_18 = arith.constant 0 : index
    %c0_19 = arith.constant 0 : index
    %35 = vector.load %arg7[%c0_18, %c0_19] : memref<1x128xf32, #tpu.memory_space<vmem>>, vector<1x128xf32>
    %36 = vector.broadcast %35 : vector<1x128xf32> to vector<32x128xf32>
    %37 = arith.addf %34, %36 : vector<32x128xf32>
    %c0_20 = arith.constant 0 : index
    %c0_21 = arith.constant 0 : index
    %38 = vector.load %arg8[%c0_20, %c0_21] : memref<32x128xf32, #tpu.memory_space<vmem>>, vector<32x128xf32>
    tpu.vector_store %arg8[%c0_20, %c0_21], %37 {strides = array<i32>} : memref<32x128xf32, #tpu.memory_space<vmem>>, vector<32x128xf32>,
    return
  }
  func.func @transform_0(%arg0: i32) -> (i32, i32) {
    %c0_i32 = arith.constant 0 : i32
    %c0_i32_0 = arith.constant 0 : i32
    return %arg0, %c0_i32 : i32, i32
  }
  func.func @transform_1(%arg0: i32) -> (i32, i32) {
    %c0_i32 = arith.constant 0 : i32
    %c0_i32_0 = arith.constant 0 : i32
    %c0_i32_1 = arith.constant 0 : i32
    return %c0_i32, %c0_i32_0 : i32, i32
  }
  func.func @transform_2(%arg0: i32) -> (i32, i32) {
    %c0_i32 = arith.constant 0 : i32
    %c0_i32_0 = arith.constant 0 : i32
    %c0_i32_1 = arith.constant 0 : i32
    return %c0_i32, %c0_i32_0 : i32, i32
  }
  func.func @transform_3(%arg0: i32) -> (i32, i32) {
    %c0_i32 = arith.constant 0 : i32
    %c0_i32_0 = arith.constant 0 : i32
    %c0_i32_1 = arith.constant 0 : i32
    return %c0_i32, %c0_i32_0 : i32, i32
  }
  func.func @transform_4(%arg0: i32) -> (i32, i32) {
    %c0_i32 = arith.constant 0 : i32
    %c0_i32_0 = arith.constant 0 : i32
    %c0_i32_1 = arith.constant 0 : i32
    return %c0_i32, %c0_i32_0 : i32, i32
  }
  func.func @transform_5(%arg0: i32) -> (i32, i32) {
    %c0_i32 = arith.constant 0 : i32
    %c0_i32_0 = arith.constant 0 : i32
    %c0_i32_1 = arith.constant 0 : i32
    return %c0_i32, %c0_i32_0 : i32, i32
  }
  func.func @transform_6(%arg0: i32) -> (i32, i32) {
    %c0_i32 = arith.constant 0 : i32
    %c0_i32_0 = arith.constant 0 : i32
    %c0_i32_1 = arith.constant 0 : i32
    return %c0_i32, %c0_i32_0 : i32, i32
  }
  func.func @transform_7(%arg0: i32) -> (i32, i32) {
    %c0_i32 = arith.constant 0 : i32
    %c0_i32_0 = arith.constant 0 : i32
    return %arg0, %c0_i32 : i32, i32
  }
}

</mosaic_0001>

<llo_original>
// kernel: poswise_ffn.1
$region0: #{poswise_ffn.1}
  #allocation0 [shape = 'u32[]', space=smem, size = 0x4, offset = 0x4, fixed_abs, tag = 'smem constant byte address 0x4 - core index']
  #allocation1 [shape = 'u32[144,128]{1,0:T(1,128)}', space=vmem, size = 0x12000, scoped, tag = 'internal scratch']
  %s0 = inlined_call_operand.vmem [shape: f32[32,128], index: 0, kind: input, shape index: {}]
  %s1 = inlined_call_operand.vmem [shape: bf16[128,256], index: 1, kind: input, shape index: {}]
  %s2 = inlined_call_operand.vmem [shape: f32[1,256], index: 2, kind: input, shape index: {}]
  %s3 = inlined_call_operand.vmem [shape: bf16[256,128], index: 3, kind: input, shape index: {}]
  %s4 = inlined_call_operand.vmem [shape: f32[1,128], index: 4, kind: input, shape index: {}]
  %s5 = inlined_call_operand.vmem [shape: f32[1,128], index: 5, kind: input, shape index: {}]
  %s6 = inlined_call_operand.vmem [shape: f32[1,128], index: 6, kind: input, shape index: {}]
  %s7 = inlined_call_operand.hbm [shape: f32[32,128], index: 7, kind: output, shape index: {}]
  %s8 = sld [smem:[#allocation0]]
  $region38: #{poswise_ffn.1} parent=0
    _
  %s10 = ssub.s32 1, %s8
  %s11 = scalar_select 0, %s10, %s8
  $region1: #{poswise_ffn.1} parent=0
    #allocation2 [shape = 'u8[16384]{0}', space=vmem, size = 0x4000, scoped, tag = 'output window, operand 0, single buffered']
    #allocation3 [shape = 's32[1]{0}', space=sflag, size = 0x4, scoped, tag = 'scoped memory for poswise_ffn.1']
    %12 = vsyncpa [#allocation3], 0
    // Predicated region
    $region2: #{poswise_ffn.1} parent=1 // pred_check
      _
    $region3: #{poswise_ffn.1} parent=1 // pred_check_branch
      %14 = sbr.rel (0) target = $region5
    $region4: #{poswise_ffn.1} parent=1 // pred_region
      _
    $region5: #{poswise_ffn.1} parent=1 // pred_fallthru
      _
    // Predicated region
    $region6: #{poswise_ffn.1} parent=1 // pred_check
      _
    $region7: #{poswise_ffn.1} parent=1 // pred_check_branch
      %16 = sbr.rel (0) target = $region9
    $region8: #{poswise_ffn.1} parent=1 // pred_region
      _
    $region9: #{poswise_ffn.1} parent=1 // pred_fallthru
      _
    // Predicated region
    $region10: #{poswise_ffn.1} parent=1 // pred_check
      _
    $region11: #{poswise_ffn.1} parent=1 // pred_check_branch
      %18 = sbr.rel (0) target = $region13
    $region12: #{poswise_ffn.1} parent=1 // pred_region
      _
    $region13: #{poswise_ffn.1} parent=1 // pred_fallthru
      _
    // Predicated region
    $region14: #{poswise_ffn.1} parent=1 // pred_check
      _
    $region15: #{poswise_ffn.1} parent=1 // pred_check_branch
      %20 = sbr.rel (0) target = $region17
    $region16: #{poswise_ffn.1} parent=1 // pred_region
      _
    $region17: #{poswise_ffn.1} parent=1 // pred_fallthru
      _
    // Predicated region
    $region18: #{poswise_ffn.1} parent=1 // pred_check
      _
    $region19: #{poswise_ffn.1} parent=1 // pred_check_branch
      %22 = sbr.rel (0) target = $region21
    $region20: #{poswise_ffn.1} parent=1 // pred_region
      _
    $region21: #{poswise_ffn.1} parent=1 // pred_fallthru
      _
    // Predicated region
    $region22: #{poswise_ffn.1} parent=1 // pred_check
      _
    $region23: #{poswise_ffn.1} parent=1 // pred_check_branch
      %24 = sbr.rel (0) target = $region25
    $region24: #{poswise_ffn.1} parent=1 // pred_region
      _
    $region25: #{poswise_ffn.1} parent=1 // pred_fallthru
      _
    // Predicated region
    $region26: #{poswise_ffn.1} parent=1 // pred_check
      _
    $region27: #{poswise_ffn.1} parent=1 // pred_check_branch
      %26 = sbr.rel (0) target = $region29
    $region28: #{poswise_ffn.1} parent=1 // pred_region
      _
    $region29: #{poswise_ffn.1} parent=1 // pred_fallthru
      _
    %v28 = vld [vmem:[%s0] sm:$0xff]
    %v29 = vld [vmem:[%s0 + $0x8] sm:$0xff]
    %v30 = vld [vmem:[%s0 + $0x10] sm:$0xff]
    %v31 = vld [vmem:[%s0 + $0x18] sm:$0xff]
    %v32 = vpack.c.bf16 %v29, %v28
    %v33 = vpack.c.bf16 %v31, %v30
    %v34 = vld [vmem:[%s1] sm:$0xff]
    %v35 = vld [vmem:[%s1 + $0x8] sm:$0xff]
    %v36 = vld [vmem:[%s1 + $0x10] sm:$0xff]
    %v37 = vld [vmem:[%s1 + $0x18] sm:$0xff]
    %v38 = vld [vmem:[%s1 + $0x20] sm:$0xff]
    %v39 = vld [vmem:[%s1 + $0x28] sm:$0xff]
    %v40 = vld [vmem:[%s1 + $0x30] sm:$0xff]
    %v41 = vld [vmem:[%s1 + $0x38] sm:$0xff]
    %v42 = vld [vmem:[%s1 + $0x40] sm:$0xff]
    %v43 = vld [vmem:[%s1 + $0x48] sm:$0xff]
    %v44 = vld [vmem:[%s1 + $0x50] sm:$0xff]
    %v45 = vld [vmem:[%s1 + $0x58] sm:$0xff]
    %v46 = vld [vmem:[%s1 + $0x60] sm:$0xff]
    %v47 = vld [vmem:[%s1 + $0x68] sm:$0xff]
    %v48 = vld [vmem:[%s1 + $0x70] sm:$0xff]
    %v49 = vld [vmem:[%s1 + $0x78] sm:$0xff]
    %v50 = vld [vmem:[%s2] sm:$0x3]
    %v52 = vlaneseq
    %v53 = vshrl.u32 %v52, 7
    %v54 = vsub.s32 0, %v53
    %v55 = vrot.slane %v50, %v54
    %v56 = vlaneseq
    %v57 = vshrl.u32 %v56, 7
    %v58 = vsub.s32 1, %v57
    %v59 = vrot.slane %v50, %v58
    %v78 = vunpack.c.l.b16 %v34
    %v79 = vunpack.c.h.b16 %v34
    %v80 = vunpack.c.l.b16 %v35
    %v81 = vunpack.c.h.b16 %v35
    %v82 = vunpack.c.l.b16 %v36
    %v83 = vunpack.c.h.b16 %v36
    %v84 = vunpack.c.l.b16 %v37
    %v85 = vunpack.c.h.b16 %v37
    %v86 = vunpack.c.l.b16 %v38
    %v87 = vunpack.c.h.b16 %v38
    %v88 = vunpack.c.l.b16 %v39
    %v89 = vunpack.c.h.b16 %v39
    %v90 = vunpack.c.l.b16 %v40
    %v91 = vunpack.c.h.b16 %v40
    %v92 = vunpack.c.l.b16 %v41
    %v93 = vunpack.c.h.b16 %v41
    %v94 = vunpack.c.l.b16 %v42
    %v95 = vunpack.c.h.b16 %v42
    %v96 = vunpack.c.l.b16 %v43
    %v97 = vunpack.c.h.b16 %v43
    %v98 = vunpack.c.l.b16 %v44
    %v99 = vunpack.c.h.b16 %v44
    %v100 = vunpack.c.l.b16 %v45
    %v101 = vunpack.c.h.b16 %v45
    %v102 = vunpack.c.l.b16 %v46
    %v103 = vunpack.c.h.b16 %v46
    %v104 = vunpack.c.l.b16 %v47
    %v105 = vunpack.c.h.b16 %v47
    %v106 = vunpack.c.l.b16 %v48
    %v107 = vunpack.c.h.b16 %v48
    %v108 = vunpack.c.l.b16 %v49
    %v109 = vunpack.c.h.b16 %v49
    %v110 = vpack.c.b16 %v80, %v78
    %v111 = vpack.c.b16 %v81, %v79
    %v112 = vpack.c.b16 %v84, %v82
    %v113 = vpack.c.b16 %v85, %v83
    %v114 = vpack.c.b16 %v88, %v86
    %v115 = vpack.c.b16 %v89, %v87
    %v116 = vpack.c.b16 %v92, %v90
    %v117 = vpack.c.b16 %v93, %v91
    %v118 = vpack.c.b16 %v96, %v94
    %v119 = vpack.c.b16 %v97, %v95
    %v120 = vpack.c.b16 %v100, %v98
    %v121 = vpack.c.b16 %v101, %v99
    %v122 = vpack.c.b16 %v104, %v102
    %v123 = vpack.c.b16 %v105, %v103
    %v124 = vpack.c.b16 %v108, %v106
    %v125 = vpack.c.b16 %v109, %v107
    %142 = vmatprep.subr.bf16.mxu0 %v111
    %143 = vmatpush1.bf16.msra.mxu0 %v110
    %144 = vmatprep.subr.bf16.mxu0 %v113
    %145 = vmatpush1.bf16.msra.mxu0 %v112
    %146 = vmatprep.subr.bf16.mxu0 %v115
    %147 = vmatpush1.bf16.msra.mxu0 %v114
    %148 = vmatprep.subr.bf16.mxu0 %v117
    %149 = vmatpush1.bf16.msra.mxu0 %v116
    %150 = vmatprep.subr.bf16.mxu0 %v119
    %151 = vmatpush1.bf16.msra.mxu0 %v118
    %152 = vmatprep.subr.bf16.mxu0 %v121
    %153 = vmatpush1.bf16.msra.mxu0 %v120
    %154 = vmatprep.subr.bf16.mxu0 %v123
    %155 = vmatpush1.bf16.msra.mxu0 %v122
    %156 = vmatprep.subr.bf16.mxu0 %v125
    %157 = vmatpush1.bf16.msra.mxu0 %v124
    %158 = vmatprep.subr.bf16.mxu0 0
    %159 = vmatpush1.bf16.msra.mxu0 0
    %160 = vmatprep.subr.bf16.mxu0 0
    %161 = vmatpush1.bf16.msra.mxu0 0
    %162 = vmatprep.subr.bf16.mxu0 0
    %163 = vmatpush1.bf16.msra.mxu0 0
    %164 = vmatprep.subr.bf16.mxu0 0
    %165 = vmatpush1.bf16.msra.mxu0 0
    %166 = vmatprep.subr.bf16.mxu0 0
    %167 = vmatpush1.bf16.msra.mxu0 0
    %168 = vmatprep.subr.bf16.mxu0 0
    %169 = vmatpush1.bf16.msra.mxu0 0
    %170 = vmatprep.subr.bf16.mxu0 0
    %171 = vmatpush1.bf16.msra.mxu0 0
    %172 = vmatprep.subr.bf16.mxu0 0
    %173 = vmatpush1.bf16.msra.mxu0 0
    %174 = vmatprep.mubr.bf16.mxu0 0
    %175 = vmatmul.mubr.bf16.gmra.mrb[0].mxu0 %v32
    %v176 = vpop.f32.mrb[0].mxu0
    %v177 = vadd.f32 %v55, %v176
    %v178 = vpop.f32.mrb[0].mxu0
    %v179 = vadd.f32 %v59, %v178
    %v180 = vpop.f32.mrb[0].mxu0
    %v181 = vadd.f32 %v55, %v180
    %v182 = vpop.f32.mrb[0].mxu0
    %v183 = vadd.f32 %v59, %v182
    %184 = vmatprep.mubr.bf16.mxu0 0
    %185 = vmatmul.mubr.bf16.gmra.mrb[0].mxu0 %v33
    %v186 = vpop.f32.mrb[0].mxu0
    %v187 = vadd.f32 %v55, %v186
    %v188 = vpop.f32.mrb[0].mxu0
    %v189 = vadd.f32 %v59, %v188
    %v190 = vpop.f32.mrb[0].mxu0
    %v191 = vadd.f32 %v55, %v190
    %v192 = vpop.f32.mrb[0].mxu0
    %v193 = vadd.f32 %v59, %v192
    %194 = vdwg.mxu0
    %v195 = vmax.f32 %v177, 0.0
    %v196 = vmax.f32 %v179, 0.0
    %v197 = vmax.f32 %v181, 0.0
    %v198 = vmax.f32 %v183, 0.0
    %v199 = vmax.f32 %v187, 0.0
    %v200 = vmax.f32 %v189, 0.0
    %v201 = vmax.f32 %v191, 0.0
    %v202 = vmax.f32 %v193, 0.0
    %v203 = vpack.c.bf16 %v197, %v195
    %v204 = vpack.c.bf16 %v198, %v196
    %v205 = vpack.c.bf16 %v201, %v199
    %v206 = vpack.c.bf16 %v202, %v200
    %v207 = vld [vmem:[%s3] sm:$0xf]
    %v208 = vld [vmem:[%s3 + $0x4] sm:$0xf]
    %v209 = vld [vmem:[%s3 + $0x8] sm:$0xf]
    %v210 = vld [vmem:[%s3 + $0xc] sm:$0xf]
    %v211 = vld [vmem:[%s3 + $0x10] sm:$0xf]
    %v212 = vld [vmem:[%s3 + $0x14] sm:$0xf]
    %v213 = vld [vmem:[%s3 + $0x18] sm:$0xf]
    %v214 = vld [vmem:[%s3 + $0x1c] sm:$0xf]
    %v215 = vld [vmem:[%s3 + $0x20] sm:$0xf]
    %v216 = vld [vmem:[%s3 + $0x24] sm:$0xf]
    %v217 = vld [vmem:[%s3 + $0x28] sm:$0xf]
    %v218 = vld [vmem:[%s3 + $0x2c] sm:$0xf]
    %v219 = vld [vmem:[%s3 + $0x30] sm:$0xf]
    %v220 = vld [vmem:[%s3 + $0x34] sm:$0xf]
    %v221 = vld [vmem:[%s3 + $0x38] sm:$0xf]
    %v222 = vld [vmem:[%s3 + $0x3c] sm:$0xf]
    %v223 = vld [vmem:[%s3 + $0x40] sm:$0xf]
    %v224 = vld [vmem:[%s3 + $0x44] sm:$0xf]
    %v225 = vld [vmem:[%s3 + $0x48] sm:$0xf]
    %v226 = vld [vmem:[%s3 + $0x4c] sm:$0xf]
    %v227 = vld [vmem:[%s3 + $0x50] sm:$0xf]
    %v228 = vld [vmem:[%s3 + $0x54] sm:$0xf]
    %v229 = vld [vmem:[%s3 + $0x58] sm:$0xf]
    %v230 = vld [vmem:[%s3 + $0x5c] sm:$0xf]
    %v231 = vld [vmem:[%s3 + $0x60] sm:$0xf]
    %v232 = vld [vmem:[%s3 + $0x64] sm:$0xf]
    %v233 = vld [vmem:[%s3 + $0x68] sm:$0xf]
    %v234 = vld [vmem:[%s3 + $0x6c] sm:$0xf]
    %v235 = vld [vmem:[%s3 + $0x70] sm:$0xf]
    %v236 = vld [vmem:[%s3 + $0x74] sm:$0xf]
    %v237 = vld [vmem:[%s3 + $0x78] sm:$0xf]
    %v238 = vld [vmem:[%s3 + $0x7c] sm:$0xf]
    %v239 = vld [vmem:[%s4] sm:$0x1]
    %v241 = vlaneseq
    %v242 = vshrl.u32 %v241, 7
    %v243 = vsub.s32 0, %v242
    %v244 = vrot.slane %v239, %v243
    %v246 = vadd.f32 %v28, %v244
    %v247 = vadd.f32 %v29, %v244
    %v248 = vadd.f32 %v30, %v244
    %v249 = vadd.f32 %v31, %v244
    %v282 = vunpack.c.l.b16 %v207
    %v283 = vunpack.c.l.b16 %v208
    %v284 = vunpack.c.l.b16 %v209
    %v285 = vunpack.c.l.b16 %v210
    %v286 = vunpack.c.l.b16 %v211
    %v287 = vunpack.c.l.b16 %v212
    %v288 = vunpack.c.l.b16 %v213
    %v289 = vunpack.c.l.b16 %v214
    %v290 = vunpack.c.l.b16 %v215
    %v291 = vunpack.c.l.b16 %v216
    %v292 = vunpack.c.l.b16 %v217
    %v293 = vunpack.c.l.b16 %v218
    %v294 = vunpack.c.l.b16 %v219
    %v295 = vunpack.c.l.b16 %v220
    %v296 = vunpack.c.l.b16 %v221
    %v297 = vunpack.c.l.b16 %v222
    %v298 = vunpack.c.l.b16 %v223
    %v299 = vunpack.c.l.b16 %v224
    %v300 = vunpack.c.l.b16 %v225
    %v301 = vunpack.c.l.b16 %v226
    %v302 = vunpack.c.l.b16 %v227
    %v303 = vunpack.c.l.b16 %v228
    %v304 = vunpack.c.l.b16 %v229
    %v305 = vunpack.c.l.b16 %v230
    %v306 = vunpack.c.l.b16 %v231
    %v307 = vunpack.c.l.b16 %v232
    %v308 = vunpack.c.l.b16 %v233
    %v309 = vunpack.c.l.b16 %v234
    %v310 = vunpack.c.l.b16 %v235
    %v311 = vunpack.c.l.b16 %v236
    %v312 = vunpack.c.l.b16 %v237
    %v313 = vunpack.c.l.b16 %v238
    %v314 = vpack.c.b16 %v283, %v282
    %v315 = vpack.c.b16 %v285, %v284
    %v316 = vpack.c.b16 %v287, %v286
    %v317 = vpack.c.b16 %v289, %v288
    %v318 = vpack.c.b16 %v291, %v290
    %v319 = vpack.c.b16 %v293, %v292
    %v320 = vpack.c.b16 %v295, %v294
    %v321 = vpack.c.b16 %v297, %v296
    %v322 = vpack.c.b16 %v299, %v298
    %v323 = vpack.c.b16 %v301, %v300
    %v324 = vpack.c.b16 %v303, %v302
    %v325 = vpack.c.b16 %v305, %v304
    %v326 = vpack.c.b16 %v307, %v306
    %v327 = vpack.c.b16 %v309, %v308
    %v328 = vpack.c.b16 %v311, %v310
    %v329 = vpack.c.b16 %v313, %v312
    %346 = vmatprep.subr.bf16.mxu0 0
    %347 = vmatpush1.bf16.msra.mxu0 %v314
    %348 = vmatprep.subr.bf16.mxu0 0
    %349 = vmatpush1.bf16.msra.mxu0 %v315
    %350 = vmatprep.subr.bf16.mxu0 0
    %351 = vmatpush1.bf16.msra.mxu0 %v316
    %352 = vmatprep.subr.bf16.mxu0 0
    %353 = vmatpush1.bf16.msra.mxu0 %v317
    %354 = vmatprep.subr.bf16.mxu0 0
    %355 = vmatpush1.bf16.msra.mxu0 %v318
    %356 = vmatprep.subr.bf16.mxu0 0
    %357 = vmatpush1.bf16.msra.mxu0 %v319
    %358 = vmatprep.subr.bf16.mxu0 0
    %359 = vmatpush1.bf16.msra.mxu0 %v320
    %360 = vmatprep.subr.bf16.mxu0 0
    %361 = vmatpush1.bf16.msra.mxu0 %v321
    %362 = vmatprep.subr.bf16.mxu0 0
    %363 = vmatpush1.bf16.msra.mxu0 %v322
    %364 = vmatprep.subr.bf16.mxu0 0
    %365 = vmatpush1.bf16.msra.mxu0 %v323
    %366 = vmatprep.subr.bf16.mxu0 0
    %367 = vmatpush1.bf16.msra.mxu0 %v324
    %368 = vmatprep.subr.bf16.mxu0 0
    %369 = vmatpush1.bf16.msra.mxu0 %v325
    %370 = vmatprep.subr.bf16.mxu0 0
    %371 = vmatpush1.bf16.msra.mxu0 %v326
    %372 = vmatprep.subr.bf16.mxu0 0
    %373 = vmatpush1.bf16.msra.mxu0 %v327
    %374 = vmatprep.subr.bf16.mxu0 0
    %375 = vmatpush1.bf16.msra.mxu0 %v328
    %376 = vmatprep.subr.bf16.mxu0 0
    %377 = vmatpush1.bf16.msra.mxu0 %v329
    %378 = vmatprep.mubr.bf16.mxu0 %v204
    %379 = vmatmul.mubr.bf16.gmra.mrb[0].mxu0 %v203
    %v380 = vpop.f32.mrb[0].mxu0
    %v381 = vadd.f32 %v246, %v380
    %v382 = vpop.f32.mrb[0].mxu0
    %v383 = vpop.f32.mrb[0].mxu0
    %v384 = vadd.f32 %v247, %v383
    %v385 = vpop.f32.mrb[0].mxu0
    %386 = vmatprep.mubr.bf16.mxu0 %v206
    %387 = vmatmul.mubr.bf16.gmra.mrb[0].mxu0 %v205
    %v388 = vpop.f32.mrb[0].mxu0
    %v389 = vadd.f32 %v248, %v388
    %v390 = vpop.f32.mrb[0].mxu0
    %v391 = vpop.f32.mrb[0].mxu0
    %v392 = vadd.f32 %v249, %v391
    %v393 = vpop.f32.mrb[0].mxu0
    %394 = vdwg.mxu0
    %395 = vadd.xlane.f32.xlu0 %v381
    %v396 = vpop.xlane.xlu0 %395
    %397 = vadd.xlane.f32.xlu0 %v384
    %v398 = vpop.xlane.xlu0 %397
    %399 = vadd.xlane.f32.xlu0 %v389
    %v400 = vpop.xlane.xlu0 %399
    %401 = vadd.xlane.f32.xlu0 %v392
    %v402 = vpop.xlane.xlu0 %401
    %v403 = vrcp.pop 128.0
    %v404 = vmul.f32 %v396, %v403
    %v405 = vmul.f32 %v398, %v403
    %v406 = vmul.f32 %v400, %v403
    %v407 = vmul.f32 %v402, %v403
    %v408 = vsub.f32 %v381, %v404
    %v409 = vsub.f32 %v384, %v405
    %v410 = vsub.f32 %v389, %v406
    %v411 = vsub.f32 %v392, %v407
    %v412 = vmul.f32 %v408, %v408
    %v413 = vmul.f32 %v409, %v409
    %v414 = vmul.f32 %v410, %v410
    %v415 = vmul.f32 %v411, %v411
    %416 = vadd.xlane.f32.xlu0 %v412
    %v417 = vpop.xlane.xlu0 %416
    %418 = vadd.xlane.f32.xlu0 %v413
    %v419 = vpop.xlane.xlu0 %418
    %420 = vadd.xlane.f32.xlu0 %v414
    %v421 = vpop.xlane.xlu0 %420
    %422 = vadd.xlane.f32.xlu0 %v415
    %v423 = vpop.xlane.xlu0 %422
    %v424 = vmul.f32 %v417, %v403
    %v425 = vmul.f32 %v419, %v403
    %v426 = vmul.f32 %v421, %v403
    %v427 = vmul.f32 %v423, %v403
    %v428 = vadd.f32 %v424, 1e-05
    %v429 = vadd.f32 %v425, 1e-05
    %v430 = vadd.f32 %v426, 1e-05
    %v431 = vadd.f32 %v427, 1e-05
    %v432 = vrsqrt.pop %v428
    %v433 = vrsqrt.pop %v429
    %v434 = vrsqrt.pop %v430
    %v435 = vrsqrt.pop %v431
    %v436 = vmul.f32 %v408, %v432
    %v437 = vmul.f32 %v409, %v433
    %v438 = vmul.f32 %v410, %v434
    %v439 = vmul.f32 %v411, %v435
    %v440 = vld [vmem:[%s5] sm:$0x1]
    %v442 = vlaneseq
    %v443 = vshrl.u32 %v442, 7
    %v444 = vsub.s32 0, %v443
    %v445 = vrot.slane %v440, %v444
    %v447 = vmul.f32 %v436, %v445
    %v448 = vmul.f32 %v437, %v445
    %v449 = vmul.f32 %v438, %v445
    %v450 = vmul.f32 %v439, %v445
    %v451 = vld [vmem:[%s6] sm:$0x1]
    %v453 = vlaneseq
    %v454 = vshrl.u32 %v453, 7
    %v455 = vsub.s32 0, %v454
    %v456 = vrot.slane %v451, %v455
    %v458 = vadd.f32 %v447, %v456
    %v459 = vadd.f32 %v448, %v456
    %v460 = vadd.f32 %v449, %v456
    %v461 = vadd.f32 %v450, %v456
    %462 = vst [vmem:[#allocation2] sm:$0xff] %v458
    %463 = vst [vmem:[#allocation2 + $0x8] sm:$0xff] %v459
    %464 = vst [vmem:[#allocation2 + $0x10] sm:$0xff] %v460
    %465 = vst [vmem:[#allocation2 + $0x18] sm:$0xff] %v461
    // Predicated region
    $region30: #{poswise_ffn.1} parent=1 // pred_check
      _
    $region31: #{poswise_ffn.1} parent=1 // pred_check_branch
      %467 = sbr.rel (0) target = $region33
    $region32: #{poswise_ffn.1} parent=1 // pred_region
      %s469 = ssub.s32 512, 512
      %470 = vsyncadd [#allocation3], %s469
      %s471 = sshll.u32 [#allocation2], 4
      %s472 = int_to_ptr.vmem [resolvable:$true] %s471
      %477 = dma.vmem_to_hbm [thread:$0]  %s472, 512, %s7, [#allocation3], 128, 128, 8
    $region33: #{poswise_ffn.1} parent=1 // pred_fallthru
      _
    // Predicated region
    $region34: #{poswise_ffn.1} parent=1 // pred_check
      _
    $region35: #{poswise_ffn.1} parent=1 // pred_check_branch
      %479 = sbr.rel (0) target = $region37
    $region36: #{poswise_ffn.1} parent=1 // pred_region
      %480 = dma.done [#allocation3], 512
    $region37: #{poswise_ffn.1} parent=1 // pred_fallthru
      _
    %481 = vsyncpa [#allocation3], 1

</llo_original>
